<compile_context>
chip_gen: v5e
topology: v5e:2x2
jax: 0.10.0
libtpu: 0.0.40
codegen_flags: <defaults>
</compile_context>

<pallas_src>
import jax
import jax.numpy as jnp
from jax.experimental import pallas as pl
from jax.experimental.pallas import tpu as pltpu


def encoder_kernel(xt_ref, w1_ref, b1_ref, w2_ref, b2_ref, o_ref):
    """One batch-on-lanes tile of fc2(relu(fc1(x))).

    xt_ref: (in_dim,  TILE_B)   streamed input tile (x transposed)
    w1_ref: (hidden,  in_dim)   VMEM-resident (native nn.Linear layout)
    b1_ref: (hidden,  1)        VMEM-resident
    w2_ref: (out_dim, hidden)   VMEM-resident
    b2_ref: (out_dim, 1)        VMEM-resident
    o_ref:  (out_dim, TILE_B)   lane-dense output tile (y transposed)
    """
    # fc1 on the MXU: (hidden, in_dim) @ (in_dim, TILE_B) -> (hidden, TILE_B)
    h = jnp.dot(w1_ref[...], xt_ref[...], preferred_element_type=jnp.float32)
    # bias (exact f32 add, broadcast along lanes) + ReLU on the VPU
    h = jnp.maximum(h + b1_ref[...], 0.0)
    # fc2 on the MXU: (out_dim, hidden) @ (hidden, TILE_B) -> (out_dim, TILE_B)
    y = jnp.dot(w2_ref[...], h, preferred_element_type=jnp.float32) + b2_ref[...]
    o_ref[...] = y.astype(o_ref.dtype)


def prepare_encoder_params(w1, b1, w2, b2):
    """One-time conversion (at init, NOT per forward call).

    Weights keep their native nn.Linear (out_features, in_features) layout —
    exactly what the batch-on-lanes kernel wants.  Biases become column
    vectors so they broadcast along the lane (batch) axis.
    """
    return (jnp.asarray(w1), jnp.asarray(b1).reshape(-1, 1),
            jnp.asarray(w2), jnp.asarray(b2).reshape(-1, 1))


def encoder_forward(x, params, *, tile_b=32768, core_parallel=False):
    """x: (B, in_dim) f32; params from prepare_encoder_params. Returns (B, out_dim).

    tile_b sizing (the (hidden, TILE_B) f32 hidden block is the dominant VMEM
    consumer at 256*TILE_B bytes):
      * v7x (64 MiB VMEM):  default 32K is comfortable; don't exceed ~64K.
      * v5e/v6e (128 MiB):  may be raised to ~128K with vmem_limit_bytes ~96 MiB.
    """
    w1, b1_col, w2, b2_col = params
    B, in_dim = x.shape
    hidden_dim, _ = w1.shape
    output_dim, _ = w2.shape

    # Batch-on-lanes: one tiny per-call transpose (8 B/row) in the wrapper.
    xt = jnp.transpose(x)                       # (in_dim, B)

    if B <= tile_b:
        tile_b_eff = B                          # single step, full-extent block
    else:
        # Lane (last) dim of the block must be a multiple of 128 when it is
        # not the full array extent; edge tile is masked by Pallas.
        tile_b_eff = max(128, (tile_b // 128) * 128)
    grid = (pl.cdiv(B, tile_b_eff),)

    dim_sem = (pltpu.CORE_PARALLEL,) if core_parallel else ("parallel",)

    grid_spec = pltpu.PrefetchScalarGridSpec(
        num_scalar_prefetch=0,
        grid=grid,
        in_specs=[
            pl.BlockSpec((in_dim, tile_b_eff), lambda i: (0, i)),       # streamed x^T
            pl.BlockSpec((hidden_dim, in_dim), lambda i: (0, 0)),       # resident
            pl.BlockSpec((hidden_dim, 1), lambda i: (0, 0)),            # resident
            pl.BlockSpec((output_dim, hidden_dim), lambda i: (0, 0)),   # resident
            pl.BlockSpec((output_dim, 1), lambda i: (0, 0)),            # resident
        ],
        out_specs=pl.BlockSpec((output_dim, tile_b_eff), lambda i: (0, i)),
    )

    yt = pl.pallas_call(
        encoder_kernel,
        out_shape=jax.ShapeDtypeStruct((output_dim, B), x.dtype),
        grid_spec=grid_spec,
        compiler_params=pltpu.CompilerParams(
            dimension_semantics=dim_sem,
            vmem_limit_bytes=48 * 1024 * 1024,
        ),
    )(xt, w1, b1_col, w2, b2_col)

    return jnp.transpose(yt)                    # (B, out_dim)


def init_linear_params(key, out_features, in_features):
    """Deterministic init mimicking nn.Linear: U(-1/sqrt(fan_in), 1/sqrt(fan_in))."""
    kw, kb = jax.random.split(key)
    bound = 1.0 / jnp.sqrt(jnp.float32(in_features))
    w = jax.random.uniform(kw, (out_features, in_features), jnp.float32, -bound, bound)
    b = jax.random.uniform(kb, (out_features,), jnp.float32, -bound, bound)
    return w, b


if __name__ == "__main__":
    # Shapes consistent with the module: VDP state dim = 2, hidden_dim = 64.
    input_dim = 2
    hidden_dim = 64
    output_dim = 2

    key = jax.random.PRNGKey(0)
    kx, k1, k2, kx2, kx3 = jax.random.split(key, 5)

    w1, b1 = init_linear_params(k1, hidden_dim, input_dim)
    w2, b2 = init_linear_params(k2, output_dim, hidden_dim)
    params = prepare_encoder_params(w1, b1, w2, b2)   # one-time, at init

    def ref_fn(xx):
        return jnp.maximum(xx @ w1.T + b1, 0.0) @ w2.T + b2

    # 1) tiny batch: single grid step, block == full batch extent
    x_small = jax.random.normal(kx, (8, input_dim), jnp.float32)
    out_small = encoder_forward(x_small, params)
    jax.block_until_ready(out_small)
    assert out_small.shape == (8, output_dim)
    assert jnp.allclose(out_small, ref_fn(x_small), atol=1e-5, rtol=1e-5)

    # 2) multi-tile batch with B NOT divisible by tile_b (edge-masked last tile)
    x_edge = jax.random.normal(kx2, (1000, input_dim), jnp.float32)
    out_edge = encoder_forward(x_edge, params, tile_b=256)
    jax.block_until_ready(out_edge)
    assert out_edge.shape == (1000, output_dim)
    assert jnp.allclose(out_edge, ref_fn(x_edge), atol=1e-5, rtol=1e-5)

    # 3) user tile_b not a multiple of 128 -> rounded down internally
    x_big = jax.random.normal(kx3, (1024, input_dim), jnp.float32)
    out_big = encoder_forward(x_big, params, tile_b=200)
    jax.block_until_ready(out_big)
    assert out_big.shape == (1024, output_dim)
    assert jnp.allclose(out_big, ref_fn(x_big), atol=1e-5, rtol=1e-5)

    print("KERNEL_OK")
</pallas_src>

<mosaic_0001>
module attributes {stable_mosaic.version = 11 : i64} {
  func.func @encoder_kernel(%arg0: i32, %arg1: memref<2x8xf32, #tpu.memory_space<vmem>>, %arg2: memref<64x2xf32, #tpu.memory_space<vmem>>, %arg3: memref<64x1xf32, #tpu.memory_space<vmem>>, %arg4: memref<2x64xf32, #tpu.memory_space<vmem>>, %arg5: memref<2x1xf32, #tpu.memory_space<vmem>>, %arg6: memref<2x8xf32, #tpu.memory_space<vmem>>) attributes {dimension_semantics = [#tpu.dimension_semantics<parallel>], iteration_bounds = array<i64: 1>, scalar_prefetch = 0 : i64, scratch_operands = 0 : i64, tpu.core_type = #tpu.core_type<tc>, window_params = [{transform_indices = @transform_0, window_bounds = array<i64: 2, 8>}, {pipeline_mode = #tpu.pipeline_mode<synchronous>, transform_indices = @transform_1, window_bounds = array<i64: 64, 2>}, {pipeline_mode = #tpu.pipeline_mode<synchronous>, transform_indices = @transform_2, window_bounds = array<i64: 64, 1>}, {pipeline_mode = #tpu.pipeline_mode<synchronous>, transform_indices = @transform_3, window_bounds = array<i64: 2, 64>}, {pipeline_mode = #tpu.pipeline_mode<synchronous>, transform_indices = @transform_4, window_bounds = array<i64: 2, 1>}, {transform_indices = @transform_5, window_bounds = array<i64: 2, 8>}]} {
    %c0 = arith.constant 0 : index
    %c0_0 = arith.constant 0 : index
    %0 = vector.load %arg2[%c0, %c0_0] : memref<64x2xf32, #tpu.memory_space<vmem>>, vector<64x2xf32>
    %c0_1 = arith.constant 0 : index
    %c0_2 = arith.constant 0 : index
    %1 = vector.load %arg1[%c0_1, %c0_2] : memref<2x8xf32, #tpu.memory_space<vmem>>, vector<2x8xf32>
    %cst = arith.constant dense<0.000000e+00> : vector<64x8xf32>
    %2 = tpu.matmul %0, %1, %cst {dimension_numbers = #tpu.dot_dimension_numbers<[1], [0], [0], [1], [0, 0, 1, 1], [], []>} : vector<64x2xf32>, vector<2x8xf32>, vector<64x8xf32> -> vector<64x8xf32>
    %c0_3 = arith.constant 0 : index
    %c0_4 = arith.constant 0 : index
    %3 = vector.load %arg3[%c0_3, %c0_4] : memref<64x1xf32, #tpu.memory_space<vmem>>, vector<64x1xf32>
    %4 = vector.broadcast %3 : vector<64x1xf32> to vector<64x8xf32>
    %5 = arith.addf %2, %4 : vector<64x8xf32>
    %cst_5 = arith.constant 0.000000e+00 : f32
    %6 = vector.broadcast %cst_5 : f32 to vector<64x8xf32>
    %7 = arith.maximumf %5, %6 : vector<64x8xf32>
    %c0_6 = arith.constant 0 : index
    %c0_7 = arith.constant 0 : index
    %8 = vector.load %arg4[%c0_6, %c0_7] : memref<2x64xf32, #tpu.memory_space<vmem>>, vector<2x64xf32>
    %cst_8 = arith.constant dense<0.000000e+00> : vector<2x8xf32>
    %9 = tpu.matmul %8, %7, %cst_8 {dimension_numbers = #tpu.dot_dimension_numbers<[1], [0], [0], [1], [0, 0, 1, 1], [], []>} : vector<2x64xf32>, vector<64x8xf32>, vector<2x8xf32> -> vector<2x8xf32>
    %c0_9 = arith.constant 0 : index
    %c0_10 = arith.constant 0 : index
    %10 = vector.load %arg5[%c0_9, %c0_10] : memref<2x1xf32, #tpu.memory_space<vmem>>, vector<2x1xf32>
    %11 = vector.broadcast %10 : vector<2x1xf32> to vector<2x8xf32>
    %12 = arith.addf %9, %11 : vector<2x8xf32>
    %c0_11 = arith.constant 0 : index
    %c0_12 = arith.constant 0 : index
    %13 = vector.load %arg6[%c0_11, %c0_12] : memref<2x8xf32, #tpu.memory_space<vmem>>, vector<2x8xf32>
    tpu.vector_store %arg6[%c0_11, %c0_12], %12 {strides = array<i32>} : memref<2x8xf32, #tpu.memory_space<vmem>>, vector<2x8xf32>,
    return
  }
  func.func @transform_0(%arg0: i32) -> (i32, i32) {
    %c0_i32 = arith.constant 0 : i32
    %c0_i32_0 = arith.constant 0 : i32
    return %c0_i32, %arg0 : i32, i32
  }
  func.func @transform_1(%arg0: i32) -> (i32, i32) {
    %c0_i32 = arith.constant 0 : i32
    %c0_i32_0 = arith.constant 0 : i32
    %c0_i32_1 = arith.constant 0 : i32
    return %c0_i32, %c0_i32_0 : i32, i32
  }
  func.func @transform_2(%arg0: i32) -> (i32, i32) {
    %c0_i32 = arith.constant 0 : i32
    %c0_i32_0 = arith.constant 0 : i32
    %c0_i32_1 = arith.constant 0 : i32
    return %c0_i32, %c0_i32_0 : i32, i32
  }
  func.func @transform_3(%arg0: i32) -> (i32, i32) {
    %c0_i32 = arith.constant 0 : i32
    %c0_i32_0 = arith.constant 0 : i32
    %c0_i32_1 = arith.constant 0 : i32
    return %c0_i32, %c0_i32_0 : i32, i32
  }
  func.func @transform_4(%arg0: i32) -> (i32, i32) {
    %c0_i32 = arith.constant 0 : i32
    %c0_i32_0 = arith.constant 0 : i32
    %c0_i32_1 = arith.constant 0 : i32
    return %c0_i32, %c0_i32_0 : i32, i32
  }
  func.func @transform_5(%arg0: i32) -> (i32, i32) {
    %c0_i32 = arith.constant 0 : i32
    %c0_i32_0 = arith.constant 0 : i32
    return %c0_i32, %arg0 : i32, i32
  }
}

</mosaic_0001>

<llo_original>
// kernel: tpu_custom_call.1
$region0: #{tpu_custom_call.1}
  #allocation0 [shape = 'u32[]', space=smem, size = 0x4, offset = 0x4, fixed_abs, tag = 'smem constant byte address 0x4 - core index']
  #allocation1 [shape = 'u32[72,128]{1,0:T(1,128)}', space=vmem, size = 0x9000, scoped, tag = 'internal scratch']
  %s0 = inlined_call_operand.vmem [shape: f32[2,8], index: 0, kind: input, shape index: {}]
  %s1 = inlined_call_operand.vmem [shape: f32[64,2], index: 1, kind: input, shape index: {}]
  %s2 = inlined_call_operand.vmem [shape: f32[64,1], index: 2, kind: input, shape index: {}]
  %s3 = inlined_call_operand.vmem [shape: f32[2,64], index: 3, kind: input, shape index: {}]
  %s4 = inlined_call_operand.vmem [shape: f32[2,1], index: 4, kind: input, shape index: {}]
  %s5 = inlined_call_operand.hbm [shape: f32[2,8], index: 5, kind: output, shape index: {}]
  %s6 = sld [smem:[#allocation0]]
  $region30: #{tpu_custom_call.1} parent=0
    _
  %s8 = ssub.s32 1, %s6
  %s9 = scalar_select 0, %s8, %s6
  $region1: #{tpu_custom_call.1} parent=0
    #allocation2 [shape = 'u8[1024]{0}', space=vmem, size = 0x400, scoped, tag = 'output window, operand 0, single buffered']
    #allocation3 [shape = 's32[1]{0}', space=sflag, size = 0x4, scoped, tag = 'scoped memory for tpu_custom_call.1']
    %10 = vsyncpa [#allocation3], 0
    // Predicated region
    $region2: #{tpu_custom_call.1} parent=1 // pred_check
      _
    $region3: #{tpu_custom_call.1} parent=1 // pred_check_branch
      %12 = sbr.rel (0) target = $region5
    $region4: #{tpu_custom_call.1} parent=1 // pred_region
      _
    $region5: #{tpu_custom_call.1} parent=1 // pred_fallthru
      _
    // Predicated region
    $region6: #{tpu_custom_call.1} parent=1 // pred_check
      _
    $region7: #{tpu_custom_call.1} parent=1 // pred_check_branch
      %14 = sbr.rel (0) target = $region9
    $region8: #{tpu_custom_call.1} parent=1 // pred_region
      _
    $region9: #{tpu_custom_call.1} parent=1 // pred_fallthru
      _
    // Predicated region
    $region10: #{tpu_custom_call.1} parent=1 // pred_check
      _
    $region11: #{tpu_custom_call.1} parent=1 // pred_check_branch
      %16 = sbr.rel (0) target = $region13
    $region12: #{tpu_custom_call.1} parent=1 // pred_region
      _
    $region13: #{tpu_custom_call.1} parent=1 // pred_fallthru
      _
    // Predicated region
    $region14: #{tpu_custom_call.1} parent=1 // pred_check
      _
    $region15: #{tpu_custom_call.1} parent=1 // pred_check_branch
      %18 = sbr.rel (0) target = $region17
    $region16: #{tpu_custom_call.1} parent=1 // pred_region
      _
    $region17: #{tpu_custom_call.1} parent=1 // pred_fallthru
      _
    // Predicated region
    $region18: #{tpu_custom_call.1} parent=1 // pred_check
      _
    $region19: #{tpu_custom_call.1} parent=1 // pred_check_branch
      %20 = sbr.rel (0) target = $region21
    $region20: #{tpu_custom_call.1} parent=1 // pred_region
      _
    $region21: #{tpu_custom_call.1} parent=1 // pred_fallthru
      _
    %v21 = vld [vmem:[%s1] sm:$0xff]
    %v22 = vld [vmem:[%s1 + $0x8] sm:$0xff]
    %v23 = vld [vmem:[%s1 + $0x10] sm:$0xff]
    %v24 = vld [vmem:[%s1 + $0x18] sm:$0xff]
    %v25 = vld [vmem:[%s1 + $0x20] sm:$0xff]
    %v26 = vld [vmem:[%s1 + $0x28] sm:$0xff]
    %v27 = vld [vmem:[%s1 + $0x30] sm:$0xff]
    %v28 = vld [vmem:[%s1 + $0x38] sm:$0xff]
    %v29 = vld [vmem:[%s0] sm:$0x3]
    %v30 = vld [vmem:[%s2] sm:$0xff]
    %v31 = vld [vmem:[%s2 + $0x8] sm:$0xff]
    %v32 = vld [vmem:[%s2 + $0x10] sm:$0xff]
    %v33 = vld [vmem:[%s2 + $0x18] sm:$0xff]
    %v34 = vld [vmem:[%s2 + $0x20] sm:$0xff]
    %v35 = vld [vmem:[%s2 + $0x28] sm:$0xff]
    %v36 = vld [vmem:[%s2 + $0x30] sm:$0xff]
    %v37 = vld [vmem:[%s2 + $0x38] sm:$0xff]
    %39 = vset.pattern.permute.xlu0 0
    %40 = vperm.xlu0 %39, %v30
    %v41 = vpop.permute.xlu0 %40
    %44 = vset.pattern.permute.xlu0 0
    %45 = vperm.xlu0 %44, %v31
    %v46 = vpop.permute.xlu0 %45
    %49 = vset.pattern.permute.xlu0 0
    %50 = vperm.xlu0 %49, %v32
    %v51 = vpop.permute.xlu0 %50
    %54 = vset.pattern.permute.xlu0 0
    %55 = vperm.xlu0 %54, %v33
    %v56 = vpop.permute.xlu0 %55
    %59 = vset.pattern.permute.xlu0 0
    %60 = vperm.xlu0 %59, %v34
    %v61 = vpop.permute.xlu0 %60
    %64 = vset.pattern.permute.xlu0 0
    %65 = vperm.xlu0 %64, %v35
    %v66 = vpop.permute.xlu0 %65
    %69 = vset.pattern.permute.xlu0 0
    %70 = vperm.xlu0 %69, %v36
    %v71 = vpop.permute.xlu0 %70
    %74 = vset.pattern.permute.xlu0 0
    %75 = vperm.xlu0 %74, %v37
    %v76 = vpop.permute.xlu0 %75
    %vm78 = vcmask 15360
    %v80 = vsel %vm78, %v21, 0
    %v83 = vsel %vm78, %v22, 0
    %v86 = vsel %vm78, %v23, 0
    %v89 = vsel %vm78, %v24, 0
    %v92 = vsel %vm78, %v25, 0
    %v95 = vsel %vm78, %v26, 0
    %v98 = vsel %vm78, %v27, 0
    %v101 = vsel %vm78, %v28, 0
    %vm103 = vcmask 1041408
    %v105 = vsel %vm103, %v29, 0
    %107 = vmatpush.msra.mxu0 0.0
    %108 = vmatpush.msra.mxu0 0.0
    %109 = vmatpush.msra.mxu0 0.0
    %110 = vmatpush.msra.mxu0 0.0
    %111 = vmatpush.msra.mxu0 0.0
    %112 = vmatpush.msra.mxu0 0.0
    %113 = vmatpush.msra.mxu0 0.0
    %114 = vmatpush.msra.mxu0 0.0
    %115 = vmatpush.msra.mxu0 0.0
    %116 = vmatpush.msra.mxu0 0.0
    %117 = vmatpush.msra.mxu0 0.0
    %118 = vmatpush.msra.mxu0 0.0
    %119 = vmatpush.msra.mxu0 0.0
    %120 = vmatpush.msra.mxu0 0.0
    %121 = vmatpush.msra.mxu0 0.0
    %122 = vmatpush.msra.mxu0 %v105
    %123 = vmatmul.f32.gmra.mxu0 %v80
    %v124 = vpop.f32.mrf.mxu0
    %v125 = vadd.f32 %v41, %v124
    %126 = vmatmul.f32.gmra.mxu0 %v83
    %v127 = vpop.f32.mrf.mxu0
    %v128 = vadd.f32 %v46, %v127
    %129 = vmatmul.f32.gmra.mxu0 %v86
    %v130 = vpop.f32.mrf.mxu0
    %v131 = vadd.f32 %v51, %v130
    %132 = vmatmul.f32.gmra.mxu0 %v89
    %v133 = vpop.f32.mrf.mxu0
    %v134 = vadd.f32 %v56, %v133
    %135 = vmatmul.f32.gmra.mxu0 %v92
    %v136 = vpop.f32.mrf.mxu0
    %v137 = vadd.f32 %v61, %v136
    %138 = vmatmul.f32.gmra.mxu0 %v95
    %v139 = vpop.f32.mrf.mxu0
    %v140 = vadd.f32 %v66, %v139
    %141 = vmatmul.f32.gmra.mxu0 %v98
    %v142 = vpop.f32.mrf.mxu0
    %v143 = vadd.f32 %v71, %v142
    %144 = vmatmul.f32.gmra.mxu0 %v101
    %v145 = vpop.f32.mrf.mxu0
    %v146 = vadd.f32 %v76, %v145
    %147 = vdwg.mxu0
    %v148 = vmax.f32 %v125, 0.0
    %v149 = vmax.f32 %v128, 0.0
    %v150 = vmax.f32 %v131, 0.0
    %v151 = vmax.f32 %v134, 0.0
    %v152 = vmax.f32 %v137, 0.0
    %v153 = vmax.f32 %v140, 0.0
    %v154 = vmax.f32 %v143, 0.0
    %v155 = vmax.f32 %v146, 0.0
    %v156 = vld [vmem:[%s3] sm:$0x3]
    %v157 = vld [vmem:[%s4] sm:$0x3]
    %159 = vset.pattern.permute.xlu0 0
    %160 = vperm.xlu0 %159, %v157
    %v161 = vpop.permute.xlu0 %160
    %vm163 = vcmask 523264
    %v165 = vsel %vm163, %v156, 0
    %167 = vmatpush.msra.mxu0 0.0
    %168 = vmatpush.msra.mxu0 0.0
    %169 = vmatpush.msra.mxu0 0.0
    %170 = vmatpush.msra.mxu0 0.0
    %171 = vmatpush.msra.mxu0 0.0
    %172 = vmatpush.msra.mxu0 0.0
    %173 = vmatpush.msra.mxu0 0.0
    %174 = vmatpush.msra.mxu0 0.0
    %175 = vmatpush.msra.mxu0 %v155
    %176 = vmatpush.msra.mxu0 %v154
    %177 = vmatpush.msra.mxu0 %v153
    %178 = vmatpush.msra.mxu0 %v152
    %179 = vmatpush.msra.mxu0 %v151
    %180 = vmatpush.msra.mxu0 %v150
    %181 = vmatpush.msra.mxu0 %v149
    %182 = vmatpush.msra.mxu0 %v148
    %183 = vmatmul.f32.gmra.mxu0 %v165
    %v184 = vpop.f32.mrf.mxu0
    %v185 = vadd.f32 %v161, %v184
    %186 = vdwg.mxu0
    %vm187 = vcmask 58368
    %188 = vst.msk [vmem:[#allocation2] sm:$0x3] %vm187, %v185
    // Predicated region
    $region22: #{tpu_custom_call.1} parent=1 // pred_check
      _
    $region23: #{tpu_custom_call.1} parent=1 // pred_check_branch
      %190 = sbr.rel (0) target = $region25
    $region24: #{tpu_custom_call.1} parent=1 // pred_region
      %192 = vsyncadd [#allocation3], 0
      %s194 = sshll.u32 [#allocation2], 4
      %s195 = int_to_ptr.vmem [resolvable:$true] %s194
      %s196 = sshll.u32 %s5, 4
      %s197 = int_to_ptr.hbm [resolvable:$true] %s196
      %199 = dma.vmem_to_hbm [thread:$0]  %s195, 32, %s197, [#allocation3]
    $region25: #{tpu_custom_call.1} parent=1 // pred_fallthru
      _
    // Predicated region
    $region26: #{tpu_custom_call.1} parent=1 // pred_check
      _
    $region27: #{tpu_custom_call.1} parent=1 // pred_check_branch
      %201 = sbr.rel (0) target = $region29
    $region28: #{tpu_custom_call.1} parent=1 // pred_region
      %203 = dma.done [#allocation3], 32
    $region29: #{tpu_custom_call.1} parent=1 // pred_fallthru
      _
    %204 = vsyncpa [#allocation3], 1

</llo_original>
